<compile_context>
chip_gen: v5e
topology: v5e:2x2
jax: 0.10.0
libtpu: 0.0.40
codegen_flags: <defaults>
</compile_context>

<pallas_src>
import jax
import jax.numpy as jnp
from jax import lax
from jax.experimental import pallas as pl
from jax.experimental.pallas import tpu as pltpu


def _contrastive_tiles_kernel(text_ref, image_ref, row_lse_ref, diag_ref, colpart_ref):
    i = pl.program_id(0)          # row block of the logits matrix
    j = pl.program_id(1)          # col block (reduction axis for row stats)
    nj = pl.num_programs(1)

    t = text_ref[...].astype(jnp.float32)    # (TB, D)
    v = image_ref[...].astype(jnp.float32)   # (TB, D)

    # F.normalize(x, dim=1): x / max(||x||, 1e-12)  ==  x * rsqrt(max(||x||^2, 1e-24))
    eps2 = jnp.float32(1e-24)
    t = t * lax.rsqrt(jnp.maximum(jnp.sum(t * t, axis=1, keepdims=True), eps2))
    v = v * lax.rsqrt(jnp.maximum(jnp.sum(v * v, axis=1, keepdims=True), eps2))

    # bf16 operands, f32 accumulation; contract D on both sides so the MXU
    # consumes the transposed operand directly (no XLU transpose of v).
    tb = t.astype(jnp.bfloat16)
    vb = v.astype(jnp.bfloat16)
    logits = lax.dot_general(
        tb, vb, (((1,), (1,)), ((), ())),
        preferred_element_type=jnp.float32)            # (TB, TB) = t @ v.T

    # logits are cosine similarities in [-1, 1] -> exp cannot overflow; a single
    # exp serves both the row-wise and the column-wise logsumexp.
    e = jnp.exp(logits)
    row_part = jnp.sum(e, axis=1, keepdims=True)       # (TB, 1)
    col_part = jnp.sum(e, axis=0, keepdims=True)       # (1, TB)

    # Per-(row block) partial column sums: written exactly once per (i, j).
    colpart_ref[...] = col_part[None]                  # (1, 1, TB)

    # Row logsumexp: accumulate sums across the column blocks in the resident
    # output block, take the log on the final column block.
    @pl.when(j == 0)
    def _():
        row_lse_ref[...] = jnp.zeros_like(row_lse_ref)

    row_lse_ref[...] += row_part

    @pl.when(j == nj - 1)
    def _():
        row_lse_ref[...] = jnp.log(row_lse_ref[...])

    # Diagonal logits (the "correct-class" scores) live in the j == i tile and
    # are computed directly as per-row dot products — no (B,B) iota/mask.
    @pl.when(j == i)
    def _():
        diag_ref[...] = jnp.sum(t * v, axis=1, keepdims=True)   # (TB, 1)


def _pick_tile(batch: int, max_tile: int = 512) -> int:
    """Square logits-tile size: full batch if small, else a 128-multiple divisor."""
    if batch <= max_tile:
        return batch
    for t in (max_tile, 256, 128):
        if batch % t == 0:
            return t
    return batch  # fallback: single block


def contrastive_loss(text_embeds: jax.Array, image_embeds: jax.Array,
                     *, max_block: int = 512) -> jax.Array:
    """Pallas TPU implementation of the symmetric contrastive (CLIP-style) loss."""
    B, D = text_embeds.shape
    assert image_embeds.shape == (B, D)
    # NOTE: for production sizes prefer D a multiple of 128 and B a multiple of 8
    # (full lane/sublane occupancy); arbitrary shapes still lower via full-dim blocks.
    TB = _pick_tile(B, max_block)
    n = B // TB

    row_lse, diag, colpart = pl.pallas_call(
        _contrastive_tiles_kernel,
        out_shape=(
            jax.ShapeDtypeStruct((B, 1), jnp.float32),     # log(sum_j exp(logits[i, :]))
            jax.ShapeDtypeStruct((B, 1), jnp.float32),     # logits[i, i]
            jax.ShapeDtypeStruct((n, 1, B), jnp.float32),  # per-row-block col exp sums
        ),
        grid_spec=pltpu.PrefetchScalarGridSpec(
            num_scalar_prefetch=0,
            grid=(n, n),
            in_specs=[
                pl.BlockSpec((TB, D), lambda i, j: (i, 0)),   # text rows
                pl.BlockSpec((TB, D), lambda i, j: (j, 0)),   # image rows (cols of logits)
            ],
            out_specs=(
                pl.BlockSpec((TB, 1), lambda i, j: (i, 0)),
                pl.BlockSpec((TB, 1), lambda i, j: (i, 0)),
                pl.BlockSpec((1, 1, TB), lambda i, j: (i, 0, j)),
            ),
        ),
        compiler_params=pltpu.CompilerParams(
            dimension_semantics=("parallel", "arbitrary"),
            vmem_limit_bytes=48 * 1024 * 1024,
        ),
    )(text_embeds, image_embeds)

    # Tiny O(n * B) combine in XLA: finish the column logsumexp and average.
    col_sum = jnp.sum(colpart[:, 0, :], axis=0)        # (B,)
    lse_col = jnp.log(col_sum)
    return 0.5 * (jnp.mean(row_lse) + jnp.mean(lse_col)) - jnp.mean(diag)


def _reference_loss(text_embeds, image_embeds):
    """Pure-JAX reference mirroring the PyTorch module, for sanity checking."""
    eps = 1e-12
    t = text_embeds / jnp.maximum(
        jnp.linalg.norm(text_embeds, axis=1, keepdims=True), eps)
    v = image_embeds / jnp.maximum(
        jnp.linalg.norm(image_embeds, axis=1, keepdims=True), eps)
    logits = t @ v.T
    labels = jnp.arange(t.shape[0])
    log_p_row = logits - jax.scipy.special.logsumexp(logits, axis=1, keepdims=True)
    log_p_col = logits.T - jax.scipy.special.logsumexp(logits.T, axis=1, keepdims=True)
    ce_row = -jnp.mean(log_p_row[labels, labels])
    ce_col = -jnp.mean(log_p_col[labels, labels])
    return 0.5 * (ce_row + ce_col)


if __name__ == "__main__":
    key = jax.random.PRNGKey(0)
    k1, k2 = jax.random.split(key)
    batch, hidden = 8, 32
    text_embeds = jax.random.normal(k1, (batch, hidden), dtype=jnp.float32)
    image_embeds = jax.random.normal(k2, (batch, hidden), dtype=jnp.float32)

    loss = contrastive_loss(text_embeds, image_embeds)
    jax.block_until_ready(loss)

    ref = _reference_loss(text_embeds, image_embeds)
    # bf16 MXU operands (f32 accumulate) bound the logit error by ~4e-3,
    # so the scalar loss agrees with the f32 reference to well under 2e-2.
    assert jnp.allclose(loss, ref, atol=2e-2, rtol=2e-2), (loss, ref)

    print("KERNEL_OK")
</pallas_src>

<mosaic_0001>
module attributes {stable_mosaic.version = 11 : i64} {
  func.func @_contrastive_tiles_kernel(%arg0: i32, %arg1: i32, %arg2: memref<8x32xf32, #tpu.memory_space<vmem>>, %arg3: memref<8x32xf32, #tpu.memory_space<vmem>>, %arg4: memref<8x1xf32, #tpu.memory_space<vmem>>, %arg5: memref<8x1xf32, #tpu.memory_space<vmem>>, %arg6: memref<1x1x8xf32, #tpu.memory_space<vmem>>) attributes {dimension_semantics = [#tpu.dimension_semantics<parallel>, #tpu.dimension_semantics<arbitrary>], iteration_bounds = array<i64: 1, 1>, scalar_prefetch = 0 : i64, scratch_operands = 0 : i64, tpu.core_type = #tpu.core_type<tc>, window_params = [{transform_indices = @transform_0, window_bounds = array<i64: 8, 32>}, {transform_indices = @transform_1, window_bounds = array<i64: 8, 32>}, {transform_indices = @transform_2, window_bounds = array<i64: 8, 1>}, {transform_indices = @transform_3, window_bounds = array<i64: 8, 1>}, {transform_indices = @transform_4, window_bounds = array<i64: 1, 1, 8>}]} {
    %c0 = arith.constant 0 : index
    %c0_0 = arith.constant 0 : index
    %0 = vector.load %arg2[%c0, %c0_0] : memref<8x32xf32, #tpu.memory_space<vmem>>, vector<8x32xf32>
    %c0_1 = arith.constant 0 : index
    %c0_2 = arith.constant 0 : index
    %1 = vector.load %arg3[%c0_1, %c0_2] : memref<8x32xf32, #tpu.memory_space<vmem>>, vector<8x32xf32>
    %2 = arith.mulf %0, %0 : vector<8x32xf32>
    %cst = arith.constant dense<0.000000e+00> : vector<8xf32>
    %3 = vector.multi_reduction <add>, %2, %cst [1] : vector<8x32xf32> to vector<8xf32>
    %4 = vector.shape_cast %3 : vector<8xf32> to vector<8x1xf32>
    %cst_3 = arith.constant 1.000000e-24 : f32
    %5 = vector.broadcast %cst_3 : f32 to vector<8x1xf32>
    %6 = arith.maximumf %4, %5 : vector<8x1xf32>
    %7 = math.rsqrt %6 : vector<8x1xf32>
    %8 = vector.broadcast %7 : vector<8x1xf32> to vector<8x32xf32>
    %9 = arith.mulf %0, %8 : vector<8x32xf32>
    %10 = arith.mulf %1, %1 : vector<8x32xf32>
    %cst_4 = arith.constant dense<0.000000e+00> : vector<8xf32>
    %11 = vector.multi_reduction <add>, %10, %cst_4 [1] : vector<8x32xf32> to vector<8xf32>
    %12 = vector.shape_cast %11 : vector<8xf32> to vector<8x1xf32>
    %cst_5 = arith.constant 1.000000e-24 : f32
    %13 = vector.broadcast %cst_5 : f32 to vector<8x1xf32>
    %14 = arith.maximumf %12, %13 : vector<8x1xf32>
    %15 = math.rsqrt %14 : vector<8x1xf32>
    %16 = vector.broadcast %15 : vector<8x1xf32> to vector<8x32xf32>
    %17 = arith.mulf %1, %16 : vector<8x32xf32>
    %18 = arith.truncf %9 : vector<8x32xf32> to vector<8x32xbf16>
    %19 = arith.truncf %17 : vector<8x32xf32> to vector<8x32xbf16>
    %cst_6 = arith.constant dense<0.000000e+00> : vector<8x8xf32>
    %20 = tpu.matmul %18, %19, %cst_6 {dimension_numbers = #tpu.dot_dimension_numbers<[1], [1], [0], [0], [0, 0, 1, 0], [], []>} : vector<8x32xbf16>, vector<8x32xbf16>, vector<8x8xf32> -> vector<8x8xf32>
    %21 = math.exp %20 : vector<8x8xf32>
    %cst_7 = arith.constant dense<0.000000e+00> : vector<8xf32>
    %22 = vector.multi_reduction <add>, %21, %cst_7 [1] : vector<8x8xf32> to vector<8xf32>
    %23 = vector.shape_cast %22 : vector<8xf32> to vector<8x1xf32>
    %cst_8 = arith.constant dense<0.000000e+00> : vector<8xf32>
    %24 = vector.multi_reduction <add>, %21, %cst_8 [0] : vector<8x8xf32> to vector<8xf32>
    %25 = vector.shape_cast %24 : vector<8xf32> to vector<1x8xf32>
    %26 = vector.shape_cast %25 : vector<1x8xf32> to vector<1x1x8xf32>
    %c0_9 = arith.constant 0 : index
    %c0_10 = arith.constant 0 : index
    %c0_11 = arith.constant 0 : index
    %27 = vector.load %arg6[%c0_9, %c0_10, %c0_11] : memref<1x1x8xf32, #tpu.memory_space<vmem>>, vector<1x1x8xf32>
    tpu.vector_store %arg6[%c0_9, %c0_10, %c0_11], %26 {strides = array<i32>} : memref<1x1x8xf32, #tpu.memory_space<vmem>>, vector<1x1x8xf32>,
    %c0_i32 = arith.constant 0 : i32
    %28 = arith.cmpi eq, %arg1, %c0_i32 : i32
    %29 = arith.extui %28 : i1 to i32
    %c0_i32_12 = arith.constant 0 : i32
    %30 = arith.cmpi ne, %29, %c0_i32_12 : i32
    scf.if %30 {
      %cst_20 = arith.constant 0.000000e+00 : f32
      %40 = vector.broadcast %cst_20 : f32 to vector<8x1xf32>
      %c0_21 = arith.constant 0 : index
      %c0_22 = arith.constant 0 : index
      %41 = vector.load %arg4[%c0_21, %c0_22] : memref<8x1xf32, #tpu.memory_space<vmem>>, vector<8x1xf32>
      tpu.vector_store %arg4[%c0_21, %c0_22], %40 {strides = array<i32>} : memref<8x1xf32, #tpu.memory_space<vmem>>, vector<8x1xf32>,
    } else {
    }
    %c0_13 = arith.constant 0 : index
    %c0_14 = arith.constant 0 : index
    %31 = vector.load %arg4[%c0_13, %c0_14] : memref<8x1xf32, #tpu.memory_space<vmem>>, vector<8x1xf32>
    %32 = arith.addf %31, %23 : vector<8x1xf32>
    %c0_15 = arith.constant 0 : index
    %c0_16 = arith.constant 0 : index
    %33 = vector.load %arg4[%c0_15, %c0_16] : memref<8x1xf32, #tpu.memory_space<vmem>>, vector<8x1xf32>
    tpu.vector_store %arg4[%c0_15, %c0_16], %32 {strides = array<i32>} : memref<8x1xf32, #tpu.memory_space<vmem>>, vector<8x1xf32>,
    %c0_i32_17 = arith.constant 0 : i32
    %34 = arith.cmpi eq, %arg1, %c0_i32_17 : i32
    %35 = arith.extui %34 : i1 to i32
    %c0_i32_18 = arith.constant 0 : i32
    %36 = arith.cmpi ne, %35, %c0_i32_18 : i32
    scf.if %36 {
      %c0_20 = arith.constant 0 : index
      %c0_21 = arith.constant 0 : index
      %40 = vector.load %arg4[%c0_20, %c0_21] : memref<8x1xf32, #tpu.memory_space<vmem>>, vector<8x1xf32>
      %41 = math.log %40 : vector<8x1xf32>
      %c0_22 = arith.constant 0 : index
      %c0_23 = arith.constant 0 : index
      %42 = vector.load %arg4[%c0_22, %c0_23] : memref<8x1xf32, #tpu.memory_space<vmem>>, vector<8x1xf32>
      tpu.vector_store %arg4[%c0_22, %c0_23], %41 {strides = array<i32>} : memref<8x1xf32, #tpu.memory_space<vmem>>, vector<8x1xf32>,
    } else {
    }
    %37 = arith.cmpi eq, %arg1, %arg0 : i32
    %38 = arith.extui %37 : i1 to i32
    %c0_i32_19 = arith.constant 0 : i32
    %39 = arith.cmpi ne, %38, %c0_i32_19 : i32
    scf.if %39 {
      %40 = arith.mulf %9, %17 : vector<8x32xf32>
      %cst_20 = arith.constant dense<0.000000e+00> : vector<8xf32>
      %41 = vector.multi_reduction <add>, %40, %cst_20 [1] : vector<8x32xf32> to vector<8xf32>
      %42 = vector.shape_cast %41 : vector<8xf32> to vector<8x1xf32>
      %c0_21 = arith.constant 0 : index
      %c0_22 = arith.constant 0 : index
      %43 = vector.load %arg5[%c0_21, %c0_22] : memref<8x1xf32, #tpu.memory_space<vmem>>, vector<8x1xf32>
      tpu.vector_store %arg5[%c0_21, %c0_22], %42 {strides = array<i32>} : memref<8x1xf32, #tpu.memory_space<vmem>>, vector<8x1xf32>,
    } else {
    }
    return
  }
  func.func @transform_0(%arg0: i32, %arg1: i32) -> (i32, i32) {
    %c0_i32 = arith.constant 0 : i32
    %c0_i32_0 = arith.constant 0 : i32
    return %arg0, %c0_i32 : i32, i32
  }
  func.func @transform_1(%arg0: i32, %arg1: i32) -> (i32, i32) {
    %c0_i32 = arith.constant 0 : i32
    %c0_i32_0 = arith.constant 0 : i32
    return %arg1, %c0_i32 : i32, i32
  }
  func.func @transform_2(%arg0: i32, %arg1: i32) -> (i32, i32) {
    %c0_i32 = arith.constant 0 : i32
    %c0_i32_0 = arith.constant 0 : i32
    return %arg0, %c0_i32 : i32, i32
  }
  func.func @transform_3(%arg0: i32, %arg1: i32) -> (i32, i32) {
    %c0_i32 = arith.constant 0 : i32
    %c0_i32_0 = arith.constant 0 : i32
    return %arg0, %c0_i32 : i32, i32
  }
  func.func @transform_4(%arg0: i32, %arg1: i32) -> (i32, i32, i32) {
    %c0_i32 = arith.constant 0 : i32
    %c0_i32_0 = arith.constant 0 : i32
    return %arg0, %c0_i32, %arg1 : i32, i32, i32
  }
}

</mosaic_0001>

<llo_original>
// kernel: tpu_custom_call.1
$region0: #{tpu_custom_call.1}
  #allocation0 [shape = 'u32[]', space=smem, size = 0x4, offset = 0x4, fixed_abs, tag = 'smem constant byte address 0x4 - core index']
  #allocation1 [shape = 'u32[72,128]{1,0:T(1,128)}', space=vmem, size = 0x9000, scoped, tag = 'internal scratch']
  %s0 = inlined_call_operand.hbm [shape: f32[8,32], index: 0, kind: input, shape index: {}]
  %s1 = inlined_call_operand.hbm [shape: f32[8,32], index: 1, kind: input, shape index: {}]
  %s2 = inlined_call_operand.vmem [shape: f32[8,1], index: 2, kind: output, shape index: {0}]
  %s3 = inlined_call_operand.vmem [shape: f32[8,1], index: 3, kind: output, shape index: {1}]
  %s4 = inlined_call_operand.hbm [shape: f32[1,1,8], index: 4, kind: output, shape index: {2}]
  %5 = xla_tuple %s2, %s3, %s4
  %s6 = sld [smem:[#allocation0]]
  $region54: #{tpu_custom_call.1} parent=0
    _
  %s8 = ssub.s32 1, %s6
  %s9 = scalar_select 0, %s8, %s6
  $region1: #{tpu_custom_call.1} parent=0
    #allocation2 [shape = 'u8[4096]{0}', space=vmem, size = 0x1000, scoped, tag = 'input window, operand 0, single buffered']
    #allocation3 [shape = 's32[1]{0}', space=sflag, size = 0x4, scoped, tag = 'scoped memory for tpu_custom_call.1']
    #allocation4 [shape = 's32[1]{0}', space=sflag, size = 0x4, scoped, tag = 'scoped memory for tpu_custom_call.1']
    #allocation5 [shape = 'u8[4096]{0}', space=vmem, size = 0x1000, scoped, tag = 'input window, operand 1, single buffered']
    #allocation6 [shape = 's32[1]{0}', space=sflag, size = 0x4, scoped, tag = 'scoped memory for tpu_custom_call.1']
    #allocation7 [shape = 'u8[512]{0}', space=vmem, size = 0x400, scoped, tag = 'output window, operand 2, single buffered']
    %10 = vsyncpa [#allocation3], 0
    %11 = vsyncpa [#allocation6], 0
    %12 = vsyncpa [#allocation4], 0
    // Predicated region
    $region2: #{tpu_custom_call.1} parent=1 // pred_check
      _
    $region3: #{tpu_custom_call.1} parent=1 // pred_check_branch
      %14 = sbr.rel (0) target = $region5
    $region4: #{tpu_custom_call.1} parent=1 // pred_region
      %16 = vsyncadd [#allocation3], 0
      %s18 = sshll.u32 %s0, 4
      %s19 = int_to_ptr.hbm [resolvable:$true] %s18
      %s20 = sshll.u32 [#allocation2], 4
      %s21 = int_to_ptr.vmem [resolvable:$true] %s20
      %23 = dma.hbm_to_vmem [thread:$0]  %s19, 128, %s21, [#allocation3]
    $region5: #{tpu_custom_call.1} parent=1 // pred_fallthru
      _
    // Predicated region
    $region6: #{tpu_custom_call.1} parent=1 // pred_check
      _
    $region7: #{tpu_custom_call.1} parent=1 // pred_check_branch
      %25 = sbr.rel (0) target = $region9
    $region8: #{tpu_custom_call.1} parent=1 // pred_region
      %27 = vsyncadd [#allocation6], 0
      %s29 = sshll.u32 %s1, 4
      %s30 = int_to_ptr.hbm [resolvable:$true] %s29
      %s31 = sshll.u32 [#allocation5], 4
      %s32 = int_to_ptr.vmem [resolvable:$true] %s31
      %34 = dma.hbm_to_vmem [thread:$0]  %s30, 128, %s32, [#allocation6]
    $region9: #{tpu_custom_call.1} parent=1 // pred_fallthru
      _
    // Predicated region
    $region10: #{tpu_custom_call.1} parent=1 // pred_check
      _
    $region11: #{tpu_custom_call.1} parent=1 // pred_check_branch
      %36 = sbr.rel (0) target = $region13
    $region12: #{tpu_custom_call.1} parent=1 // pred_region
      %38 = dma.done [#allocation3], 128
    $region13: #{tpu_custom_call.1} parent=1 // pred_fallthru
      _
    // Predicated region
    $region14: #{tpu_custom_call.1} parent=1 // pred_check
      _
    $region15: #{tpu_custom_call.1} parent=1 // pred_check_branch
      %40 = sbr.rel (0) target = $region17
    $region16: #{tpu_custom_call.1} parent=1 // pred_region
      %42 = dma.done [#allocation6], 128
    $region17: #{tpu_custom_call.1} parent=1 // pred_fallthru
      _
    %v44 = vld [vmem:[#allocation2] sm:$0xff]
    %v45 = vld [vmem:[#allocation5] sm:$0xff]
    %v46 = vmul.f32 %v44, %v44
    %vm47 = vcmask 261120
    %v48 = vsel %vm47, %v46, 0.0
    %49 = vadd.xlane.f32.xlu0 %v48
    %v50 = vpop.xlane.xlu0 %49
    %v51 = vmax.f32 %v50, 1e-24
    %v52 = vrsqrt.pop %v51
    %v53 = vmul.f32 %v52, %v51
    %v54 = vmul.f32 %v53, %v52
    %v55 = vmul.f32 0.5, %v54
    %v56 = vsub.f32 1.5, %v55
    %v57 = vmul.f32 %v52, %v56
    %vm58 = vweird.f32 %v51
    %vm59 = vweird.f32 %v52
    %vm60 = vmor %vm58, %vm59
    %v61 = vsel %vm60, %v52, %v57
    %v62 = vmul.f32 %v44, %v61
    %v63 = vmul.f32 %v45, %v45
    %v64 = vsel %vm47, %v63, 0.0
    %65 = vadd.xlane.f32.xlu0 %v64
    %v66 = vpop.xlane.xlu0 %65
    %v67 = vmax.f32 %v66, 1e-24
    %v68 = vrsqrt.pop %v67
    %v69 = vmul.f32 %v68, %v67
    %v70 = vmul.f32 %v69, %v68
    %v71 = vmul.f32 0.5, %v70
    %v72 = vsub.f32 1.5, %v71
    %v73 = vmul.f32 %v68, %v72
    %vm74 = vweird.f32 %v67
    %vm75 = vweird.f32 %v68
    %vm76 = vmor %vm74, %vm75
    %v77 = vsel %vm76, %v68, %v73
    %v78 = vmul.f32 %v45, %v77
    %v79 = vpack.c.bf16 %v62, %v62
    %v80 = vpack.c.bf16 %v78, %v78
    %v82 = vsel %vm47, %v79, 0
    %v85 = vsel %vm47, %v80, 0
    %87 = vmatpush.bf16.xpose.msra.mxu0 0
    %88 = vmatpush.bf16.xpose.msra.mxu0 0
    %89 = vmatpush.bf16.xpose.msra.mxu0 0
    %90 = vmatpush.bf16.xpose.msra.mxu0 0
    %91 = vmatpush.bf16.xpose.msra.mxu0 0
    %92 = vmatpush.bf16.xpose.msra.mxu0 0
    %93 = vmatpush.bf16.xpose.msra.mxu0 0
    %94 = vmatpush.bf16.xpose.msra.mxu0 %v85
    %95 = vmatmul.bf16.gmra.mxu0 %v82
    %v96 = vpop.f32.mrf.mxu0
    %v97 = vadd.f32 0.0, %v96
    %v98 = vpop.f32.mrf.mxu0
    %99 = vdwg.mxu0
    %v100 = vmul.f32 %v97, 1.442695
    %v101 = vpow.pop %v100
    %vm102 = vcmask 64512
    %v103 = vsel %vm102, %v101, 0.0
    %104 = vadd.xlane.f32.xlu0 %v103
    %v105 = vpop.xlane.xlu0 %104
    %v106 = vrot.slane %v103, 4
    %v107 = vadd.f32 %v103, %v106
    %v108 = vrot.slane %v107, 2
    %v109 = vadd.f32 %v107, %v108
    %v110 = vrot.slane %v109, 1
    %v111 = vadd.f32 %v109, %v110
    %vm112 = vcmask 57344
    %113 = vst.msk [vmem:[#allocation7] sm:$0x1] %vm112, %v111
    %p114 = scmp.eq.s32.totalorder 0, 0
    // Predicated region
    $region18: #{tpu_custom_call.1} parent=1 // pred_check
      %p115 = pneg %p114
    $region19: #{tpu_custom_call.1} parent=1 // pred_check_branch
      %117 = sbr.rel (%p115) target = $region21
    $region20: #{tpu_custom_call.1} parent=1 // pred_region
      %vm118 = vcmask 7168
      %119 = vst.msk [vmem:[%s2] sm:$0xff] %vm118, 0.0
    $region21: #{tpu_custom_call.1} parent=1 // pred_fallthru
      _
    %v120 = vld [vmem:[%s2] sm:$0xff]
    %v121 = vadd.f32 %v120, %v105
    %vm122 = vcmask 7168
    %123 = vst.msk [vmem:[%s2] sm:$0xff] %vm122, %v121
    // Predicated region
    $region22: #{tpu_custom_call.1} parent=1 // pred_check
      %p124 = pneg %p114
    $region23: #{tpu_custom_call.1} parent=1 // pred_check_branch
      %126 = sbr.rel (%p124) target = $region25
    $region24: #{tpu_custom_call.1} parent=1 // pred_region
      %v127 = vld [vmem:[%s2] sm:$0xff]
      %v128 = vlog2.pop %v127
      %v129 = vmul.f32 %v128, 0.6931472
      %130 = vst.msk [vmem:[%s2] sm:$0xff] %vm122, %v129
    $region25: #{tpu_custom_call.1} parent=1 // pred_fallthru
      _
    %p131 = scmp.eq.s32.totalorder 0, 0
    // Predicated region
    $region26: #{tpu_custom_call.1} parent=1 // pred_check
      %p132 = pneg %p131
    $region27: #{tpu_custom_call.1} parent=1 // pred_check_branch
      %134 = sbr.rel (%p132) target = $region29
    $region28: #{tpu_custom_call.1} parent=1 // pred_region
      %v135 = vmul.f32 %v62, %v78
      %v136 = vsel %vm47, %v135, 0.0
      %137 = vadd.xlane.f32.xlu0 %v136
      %v138 = vpop.xlane.xlu0 %137
      %139 = vst.msk [vmem:[%s3] sm:$0xff] %vm122, %v138
    $region29: #{tpu_custom_call.1} parent=1 // pred_fallthru
      _
    // Predicated region
    $region30: #{tpu_custom_call.1} parent=1 // pred_check
      _
    $region31: #{tpu_custom_call.1} parent=1 // pred_check_branch
      %141 = sbr.rel (0) target = $region33
    $region32: #{tpu_custom_call.1} parent=1 // pred_region
      _
    $region33: #{tpu_custom_call.1} parent=1 // pred_fallthru
      _
    // Predicated region
    $region34: #{tpu_custom_call.1} parent=1 // pred_check
      _
    $region35: #{tpu_custom_call.1} parent=1 // pred_check_branch
      %143 = sbr.rel (0) target = $region37
    $region36: #{tpu_custom_call.1} parent=1 // pred_region
      _
    $region37: #{tpu_custom_call.1} parent=1 // pred_fallthru
      _
    // Predicated region
    $region38: #{tpu_custom_call.1} parent=1 // pred_check
      _
    $region39: #{tpu_custom_call.1} parent=1 // pred_check_branch
      %145 = sbr.rel (0) target = $region41
    $region40: #{tpu_custom_call.1} parent=1 // pred_region
      %147 = vsyncadd [#allocation4], 0
      %s149 = sshll.u32 [#allocation7], 4
      %s150 = int_to_ptr.vmem [resolvable:$true] %s149
      %s151 = sshll.u32 %s4, 4
      %s152 = int_to_ptr.hbm [resolvable:$true] %s151
      %154 = dma.vmem_to_hbm [thread:$0]  %s150, 16, %s152, [#allocation4]
    $region41: #{tpu_custom_call.1} parent=1 // pred_fallthru
      _
    // Predicated region
    $region42: #{tpu_custom_call.1} parent=1 // pred_check
      _
    $region43: #{tpu_custom_call.1} parent=1 // pred_check_branch
      %156 = sbr.rel (0) target = $region45
    $region44: #{tpu_custom_call.1} parent=1 // pred_region
      _
    $region45: #{tpu_custom_call.1} parent=1 // pred_fallthru
      _
    // Predicated region
    $region46: #{tpu_custom_call.1} parent=1 // pred_check
      _
    $region47: #{tpu_custom_call.1} parent=1 // pred_check_branch
      %158 = sbr.rel (0) target = $region49
    $region48: #{tpu_custom_call.1} parent=1 // pred_region
      _
    $region49: #{tpu_custom_call.1} parent=1 // pred_fallthru
      _
    // Predicated region
    $region50: #{tpu_custom_call.1} parent=1 // pred_check
      _
    $region51: #{tpu_custom_call.1} parent=1 // pred_check_branch
      %160 = sbr.rel (0) target = $region53
    $region52: #{tpu_custom_call.1} parent=1 // pred_region
      %162 = dma.done [#allocation4], 16
    $region53: #{tpu_custom_call.1} parent=1 // pred_fallthru
      _
    %163 = vsyncpa [#allocation3], 1
    %164 = vsyncpa [#allocation6], 1
    %165 = vsyncpa [#allocation4], 1

</llo_original>
